<compile_context>
chip_gen: v5e
topology: v5e:2x2
jax: 0.10.0
libtpu: 0.0.40
codegen_flags: <defaults>
</compile_context>

<pallas_src>
import functools

import jax
import jax.numpy as jnp
import numpy as np
from jax import lax
from jax.experimental import pallas as pl
from jax.experimental.pallas import tpu as pltpu


# --------------------------------------------------------------------------------------
# Fast path: embedding table resident in VMEM, gather = dynamic in-VMEM row reads.
# --------------------------------------------------------------------------------------
def _token_embedding_vmem_kernel(ids_ref, emb_ref, pos_ref, out_ref,
                                 *, seq_len, tb, vocab_rows):
    # ids_ref : (batch*seq_len,)          int32  SMEM (scalar prefetch)
    # emb_ref : (vocab_rows, num_hid)     VMEM   (whole table, loaded once — invariant block)
    # pos_ref : (seq_len, num_hid)        VMEM   (rows 0..seq_len-1 of the positional table)
    # out_ref : (tb, seq_len, num_hid)    VMEM   (tb batch rows per grid step)
    g = pl.program_id(0)

    for bi in range(tb):  # small static unroll over the per-step batch rows
        base = (g * tb + bi) * seq_len

        def body(s, carry):
            row = jnp.clip(ids_ref[base + s], 0, vocab_rows - 1)
            emb_row = emb_ref[pl.ds(row, 1), :].astype(jnp.float32)
            pos_row = pos_ref[pl.ds(s, 1), :].astype(jnp.float32)
            out_ref[bi, pl.ds(s, 1), :] = (emb_row + pos_row).astype(out_ref.dtype)
            return carry

        lax.fori_loop(0, seq_len, body, 0, unroll=min(8, seq_len))


# --------------------------------------------------------------------------------------
# Large-table path: table stays in HBM, bounded sliding-window row DMAs into VMEM.
# --------------------------------------------------------------------------------------
def _token_embedding_hbm_kernel(ids_ref, emb_hbm, pos_ref, out_ref,
                                gather_buf, dma_sems,
                                *, seq_len, tb, vocab_rows, window):
    # ids_ref    : (batch*seq_len,)        int32  SMEM (scalar prefetch)
    # emb_hbm    : (vocab_rows, num_hid)          HBM  (memory_space=pl.ANY, manual DMA)
    # pos_ref    : (seq_len, num_hid)             VMEM
    # out_ref    : (tb, seq_len, num_hid)         VMEM
    # gather_buf : (tb*seq_len, num_hid)          VMEM scratch (gather destination)
    # dma_sems   : (window,)                      DMA semaphore pool (O(1), not O(seq_len))
    g = pl.program_id(0)
    n_tok = tb * seq_len
    base = g * n_tok

    def copy_for(t, slot):
        row = jnp.clip(ids_ref[base + t], 0, vocab_rows - 1)
        return pltpu.make_async_copy(
            emb_hbm.at[pl.ds(row, 1)],        # (1, num_hid) source row in HBM
            gather_buf.at[pl.ds(t, 1)],       # (1, num_hid) destination row in VMEM
            dma_sems.at[slot],
        )

    # Prime the window of in-flight copies.
    n_prime = min(window, n_tok)

    def prime_body(t, carry):
        copy_for(t, t % window).start()
        return carry

    lax.fori_loop(0, n_prime, prime_body, 0, unroll=True)

    # Sliding window: wait on copy t, immediately launch copy t + window.
    def stream_body(t, carry):
        slot = t % window
        copy_for(t, slot).wait()

        @pl.when(t + window < n_tok)
        def _():
            copy_for(t + window, slot).start()

        return carry

    lax.fori_loop(0, n_tok, stream_body, 0)

    # One vectorized add + lane-dense store per batch row of the step.
    pos = pos_ref[...].astype(jnp.float32)
    for bi in range(tb):
        rows = gather_buf[pl.ds(bi * seq_len, seq_len), :].astype(jnp.float32)
        out_ref[bi] = (rows + pos).astype(out_ref.dtype)


# --------------------------------------------------------------------------------------
# Wrapper
# --------------------------------------------------------------------------------------
def token_embedding(ids, emb_table, pos_table, *,
                    vmem_table_budget_bytes=8 * 1024 * 1024,   # conservative for v7x's 64 MiB VMEM
                    block_bytes_budget=4 * 1024 * 1024,        # per-step output block budget
                    dma_window=8):
    """ids: (batch, seq_len) int -> (batch, seq_len, num_hid). Matches emb(ids)+pos_emb(arange)."""
    batch, seq_len = ids.shape
    vocab_rows, num_hid = emb_table.shape
    maxlen, pos_hid = pos_table.shape
    assert pos_hid == num_hid, "embedding and positional tables must share num_hid"
    assert seq_len <= maxlen, "seq_len must be <= maxlen for the positional table"

    itemsize = jnp.dtype(emb_table.dtype).itemsize
    min_sublane = (8 * 4) // itemsize  # 8 for f32, 16 for bf16, 32 for int8
    assert seq_len % min_sublane == 0 or seq_len == maxlen, (
        f"seq_len={seq_len} must be a multiple of {min_sublane} (dtype {emb_table.dtype}) "
        f"or equal to maxlen={maxlen} for TPU sublane tiling of the positional block")

    ids_flat = ids.reshape(-1).astype(jnp.int32)   # 1D scalar-prefetch array (cheap SMEM padding)

    # Pick how many batch rows to process per grid step (amortize per-step overhead).
    row_bytes = seq_len * num_hid * itemsize
    cap = max(1, min(64, block_bytes_budget // max(row_bytes, 1)))
    tb = 1
    for d in range(min(batch, cap), 0, -1):
        if batch % d == 0:
            tb = d
            break
    grid = (batch // tb,)

    table_bytes = vocab_rows * num_hid * itemsize
    pos_block_bytes = seq_len * num_hid * itemsize
    out_block_bytes = tb * seq_len * num_hid * itemsize

    use_vmem_table = table_bytes <= vmem_table_budget_bytes

    if use_vmem_table:
        kernel = functools.partial(
            _token_embedding_vmem_kernel,
            seq_len=seq_len, tb=tb, vocab_rows=vocab_rows)
        in_specs = [
            # Whole token table as an invariant VMEM block -> DMA'd from HBM once.
            pl.BlockSpec((vocab_rows, num_hid), lambda g, ids: (0, 0)),
            # Only the first seq_len rows of the positional table.
            pl.BlockSpec((seq_len, num_hid), lambda g, ids: (0, 0)),
        ]
        scratch_shapes = []
        vmem_est = 2 * (table_bytes + pos_block_bytes + out_block_bytes)
    else:
        window = max(1, min(dma_window, tb * seq_len))
        kernel = functools.partial(
            _token_embedding_hbm_kernel,
            seq_len=seq_len, tb=tb, vocab_rows=vocab_rows, window=window)
        in_specs = [
            pl.BlockSpec(memory_space=pl.ANY),                          # table stays in HBM
            pl.BlockSpec((seq_len, num_hid), lambda g, ids: (0, 0)),
        ]
        scratch_shapes = [
            pltpu.VMEM((tb * seq_len, num_hid), emb_table.dtype),       # gather destination
            pltpu.SemaphoreType.DMA((window,)),                         # bounded semaphore pool
        ]
        vmem_est = 2 * (pos_block_bytes + out_block_bytes) + out_block_bytes

    vmem_limit = None
    if vmem_est > (30 << 20):   # default scoped VMEM is 16/32 MiB; raise only when needed
        vmem_limit = int(min(vmem_est * 1.25 + (1 << 20), 120 << 20))

    grid_spec = pltpu.PrefetchScalarGridSpec(
        num_scalar_prefetch=1,                      # ids -> SMEM before the grid runs
        grid=grid,
        in_specs=in_specs,
        out_specs=pl.BlockSpec((tb, seq_len, num_hid), lambda g, ids: (g, 0, 0)),
        scratch_shapes=scratch_shapes,
    )

    return pl.pallas_call(
        kernel,
        out_shape=jax.ShapeDtypeStruct((batch, seq_len, num_hid), emb_table.dtype),
        grid_spec=grid_spec,
        compiler_params=pltpu.CompilerParams(
            dimension_semantics=("parallel",),      # no-op on v5e/v6e (1 TC), shards steps on v7x
            vmem_limit_bytes=vmem_limit,
        ),
    )(ids_flat, emb_table, pos_table)


if __name__ == "__main__":
    # Small, module-consistent shapes (nn.Embedding(maxlen, num_hid) in the original).
    maxlen = 128
    num_hid = 128
    batch = 2
    seq_len = 8

    key = jax.random.PRNGKey(0)
    k_ids, k_emb, k_pos = jax.random.split(key, 3)

    ids = jax.random.randint(k_ids, (batch, seq_len), 0, maxlen, dtype=jnp.int32)
    emb_table = jax.random.normal(k_emb, (maxlen, num_hid), dtype=jnp.float32)
    pos_table = jax.random.normal(k_pos, (maxlen, num_hid), dtype=jnp.float32)

    # Pure-JAX reference: emb(x) + pos_emb(arange(seq_len))[None]
    ref = jnp.take(emb_table, ids, axis=0) + pos_table[:seq_len][None, :, :]

    # 1) Default: VMEM-resident fast path (the demo table is only 64 KiB).
    out_fast = jax.block_until_ready(token_embedding(ids, emb_table, pos_table))
    np.testing.assert_allclose(np.asarray(out_fast), np.asarray(ref), rtol=1e-6, atol=1e-6)

    # 2) Force the large-table HBM-gather path to exercise the sliding-window DMA code too.
    out_hbm = jax.block_until_ready(
        token_embedding(ids, emb_table, pos_table, vmem_table_budget_bytes=0))
    np.testing.assert_allclose(np.asarray(out_hbm), np.asarray(ref), rtol=1e-6, atol=1e-6)

    print("KERNEL_OK")
</pallas_src>

<mosaic_0001>
module attributes {stable_mosaic.version = 11 : i64} {
  func.func @_token_embedding_vmem_kernel(%arg0: i32, %arg1: memref<16xi32, #tpu.memory_space<smem>>, %arg2: memref<128x128xf32, #tpu.memory_space<vmem>>, %arg3: memref<8x128xf32, #tpu.memory_space<vmem>>, %arg4: memref<2x8x128xf32, #tpu.memory_space<vmem>>) attributes {dimension_semantics = [#tpu.dimension_semantics<parallel>], iteration_bounds = array<i64: 1>, scalar_prefetch = 1 : i64, scratch_operands = 0 : i64, tpu.core_type = #tpu.core_type<tc>, window_params = [{pipeline_mode = #tpu.pipeline_mode<synchronous>, transform_indices = @transform_0, window_bounds = array<i64: 128, 128>}, {transform_indices = @transform_1, window_bounds = array<i64: 8, 128>}, {transform_indices = @transform_2, window_bounds = array<i64: 2, 8, 128>}]} {
    %c2_i32 = arith.constant 2 : i32
    %0 = arith.muli %arg0, %c2_i32 : i32
    %c0_i32 = arith.constant 0 : i32
    %1 = arith.addi %0, %c0_i32 : i32
    %c8_i32 = arith.constant 8 : i32
    %2 = arith.muli %1, %c8_i32 : i32
    %c0_i32_0 = arith.constant 0 : i32
    %3 = arith.addi %2, %c0_i32_0 : i32
    %4 = arith.index_cast %3 : i32 to index
    %5 = memref.load %arg1[%4] : memref<16xi32, #tpu.memory_space<smem>>
    %c0_i32_1 = arith.constant 0 : i32
    %c127_i32 = arith.constant 127 : i32
    %6 = arith.maxsi %c0_i32_1, %5 : i32
    %7 = arith.minsi %c127_i32, %6 : i32
    %8 = arith.index_cast %7 : i32 to index
    %c0 = arith.constant 0 : index
    %9 = vector.load %arg2[%8, %c0] : memref<128x128xf32, #tpu.memory_space<vmem>>, vector<1x128xf32>
    %10 = arith.index_cast %c0_i32_0 : i32 to index
    %c0_2 = arith.constant 0 : index
    %11 = vector.load %arg3[%10, %c0_2] : memref<8x128xf32, #tpu.memory_space<vmem>>, vector<1x128xf32>
    %12 = arith.addf %9, %11 : vector<1x128xf32>
    %c0_3 = arith.constant 0 : index
    %13 = arith.index_cast %c0_i32_0 : i32 to index
    %c0_4 = arith.constant 0 : index
    %14 = vector.load %arg4[%c0_3, %13, %c0_4] : memref<2x8x128xf32, #tpu.memory_space<vmem>>, vector<1x1x128xf32>
    %15 = vector.shape_cast %14 : vector<1x1x128xf32> to vector<1x128xf32>
    %16 = vector.shape_cast %12 : vector<1x128xf32> to vector<1x1x128xf32>
    tpu.vector_store %arg4[%c0_3, %13, %c0_4], %16 {strides = array<i32>} : memref<2x8x128xf32, #tpu.memory_space<vmem>>, vector<1x1x128xf32>,
    %c1_i32 = arith.constant 1 : i32
    %17 = arith.addi %2, %c1_i32 : i32
    %18 = arith.index_cast %17 : i32 to index
    %19 = memref.load %arg1[%18] : memref<16xi32, #tpu.memory_space<smem>>
    %c0_i32_5 = arith.constant 0 : i32
    %c127_i32_6 = arith.constant 127 : i32
    %20 = arith.maxsi %c0_i32_5, %19 : i32
    %21 = arith.minsi %c127_i32_6, %20 : i32
    %22 = arith.index_cast %21 : i32 to index
    %c0_7 = arith.constant 0 : index
    %23 = vector.load %arg2[%22, %c0_7] : memref<128x128xf32, #tpu.memory_space<vmem>>, vector<1x128xf32>
    %24 = arith.index_cast %c1_i32 : i32 to index
    %c0_8 = arith.constant 0 : index
    %25 = vector.load %arg3[%24, %c0_8] : memref<8x128xf32, #tpu.memory_space<vmem>>, vector<1x128xf32>
    %26 = arith.addf %23, %25 : vector<1x128xf32>
    %c0_9 = arith.constant 0 : index
    %27 = arith.index_cast %c1_i32 : i32 to index
    %c0_10 = arith.constant 0 : index
    %28 = vector.load %arg4[%c0_9, %27, %c0_10] : memref<2x8x128xf32, #tpu.memory_space<vmem>>, vector<1x1x128xf32>
    %29 = vector.shape_cast %28 : vector<1x1x128xf32> to vector<1x128xf32>
    %30 = vector.shape_cast %26 : vector<1x128xf32> to vector<1x1x128xf32>
    tpu.vector_store %arg4[%c0_9, %27, %c0_10], %30 {strides = array<i32>} : memref<2x8x128xf32, #tpu.memory_space<vmem>>, vector<1x1x128xf32>,
    %c2_i32_11 = arith.constant 2 : i32
    %31 = arith.addi %2, %c2_i32_11 : i32
    %32 = arith.index_cast %31 : i32 to index
    %33 = memref.load %arg1[%32] : memref<16xi32, #tpu.memory_space<smem>>
    %c0_i32_12 = arith.constant 0 : i32
    %c127_i32_13 = arith.constant 127 : i32
    %34 = arith.maxsi %c0_i32_12, %33 : i32
    %35 = arith.minsi %c127_i32_13, %34 : i32
    %36 = arith.index_cast %35 : i32 to index
    %c0_14 = arith.constant 0 : index
    %37 = vector.load %arg2[%36, %c0_14] : memref<128x128xf32, #tpu.memory_space<vmem>>, vector<1x128xf32>
    %38 = arith.index_cast %c2_i32_11 : i32 to index
    %c0_15 = arith.constant 0 : index
    %39 = vector.load %arg3[%38, %c0_15] : memref<8x128xf32, #tpu.memory_space<vmem>>, vector<1x128xf32>
    %40 = arith.addf %37, %39 : vector<1x128xf32>
    %c0_16 = arith.constant 0 : index
    %41 = arith.index_cast %c2_i32_11 : i32 to index
    %c0_17 = arith.constant 0 : index
    %42 = vector.load %arg4[%c0_16, %41, %c0_17] : memref<2x8x128xf32, #tpu.memory_space<vmem>>, vector<1x1x128xf32>
    %43 = vector.shape_cast %42 : vector<1x1x128xf32> to vector<1x128xf32>
    %44 = vector.shape_cast %40 : vector<1x128xf32> to vector<1x1x128xf32>
    tpu.vector_store %arg4[%c0_16, %41, %c0_17], %44 {strides = array<i32>} : memref<2x8x128xf32, #tpu.memory_space<vmem>>, vector<1x1x128xf32>,
    %c3_i32 = arith.constant 3 : i32
    %45 = arith.addi %2, %c3_i32 : i32
    %46 = arith.index_cast %45 : i32 to index
    %47 = memref.load %arg1[%46] : memref<16xi32, #tpu.memory_space<smem>>
    %c0_i32_18 = arith.constant 0 : i32
    %c127_i32_19 = arith.constant 127 : i32
    %48 = arith.maxsi %c0_i32_18, %47 : i32
    %49 = arith.minsi %c127_i32_19, %48 : i32
    %50 = arith.index_cast %49 : i32 to index
    %c0_20 = arith.constant 0 : index
    %51 = vector.load %arg2[%50, %c0_20] : memref<128x128xf32, #tpu.memory_space<vmem>>, vector<1x128xf32>
    %52 = arith.index_cast %c3_i32 : i32 to index
    %c0_21 = arith.constant 0 : index
    %53 = vector.load %arg3[%52, %c0_21] : memref<8x128xf32, #tpu.memory_space<vmem>>, vector<1x128xf32>
    %54 = arith.addf %51, %53 : vector<1x128xf32>
    %c0_22 = arith.constant 0 : index
    %55 = arith.index_cast %c3_i32 : i32 to index
    %c0_23 = arith.constant 0 : index
    %56 = vector.load %arg4[%c0_22, %55, %c0_23] : memref<2x8x128xf32, #tpu.memory_space<vmem>>, vector<1x1x128xf32>
    %57 = vector.shape_cast %56 : vector<1x1x128xf32> to vector<1x128xf32>
    %58 = vector.shape_cast %54 : vector<1x128xf32> to vector<1x1x128xf32>
    tpu.vector_store %arg4[%c0_22, %55, %c0_23], %58 {strides = array<i32>} : memref<2x8x128xf32, #tpu.memory_space<vmem>>, vector<1x1x128xf32>,
    %c4_i32 = arith.constant 4 : i32
    %59 = arith.addi %2, %c4_i32 : i32
    %60 = arith.index_cast %59 : i32 to index
    %61 = memref.load %arg1[%60] : memref<16xi32, #tpu.memory_space<smem>>
    %c0_i32_24 = arith.constant 0 : i32
    %c127_i32_25 = arith.constant 127 : i32
    %62 = arith.maxsi %c0_i32_24, %61 : i32
    %63 = arith.minsi %c127_i32_25, %62 : i32
    %64 = arith.index_cast %63 : i32 to index
    %c0_26 = arith.constant 0 : index
    %65 = vector.load %arg2[%64, %c0_26] : memref<128x128xf32, #tpu.memory_space<vmem>>, vector<1x128xf32>
    %66 = arith.index_cast %c4_i32 : i32 to index
    %c0_27 = arith.constant 0 : index
    %67 = vector.load %arg3[%66, %c0_27] : memref<8x128xf32, #tpu.memory_space<vmem>>, vector<1x128xf32>
    %68 = arith.addf %65, %67 : vector<1x128xf32>
    %c0_28 = arith.constant 0 : index
    %69 = arith.index_cast %c4_i32 : i32 to index
    %c0_29 = arith.constant 0 : index
    %70 = vector.load %arg4[%c0_28, %69, %c0_29] : memref<2x8x128xf32, #tpu.memory_space<vmem>>, vector<1x1x128xf32>
    %71 = vector.shape_cast %70 : vector<1x1x128xf32> to vector<1x128xf32>
    %72 = vector.shape_cast %68 : vector<1x128xf32> to vector<1x1x128xf32>
    tpu.vector_store %arg4[%c0_28, %69, %c0_29], %72 {strides = array<i32>} : memref<2x8x128xf32, #tpu.memory_space<vmem>>, vector<1x1x128xf32>,
    %c5_i32 = arith.constant 5 : i32
    %73 = arith.addi %2, %c5_i32 : i32
    %74 = arith.index_cast %73 : i32 to index
    %75 = memref.load %arg1[%74] : memref<16xi32, #tpu.memory_space<smem>>
    %c0_i32_30 = arith.constant 0 : i32
    %c127_i32_31 = arith.constant 127 : i32
    %76 = arith.maxsi %c0_i32_30, %75 : i32
    %77 = arith.minsi %c127_i32_31, %76 : i32
    %78 = arith.index_cast %77 : i32 to index
    %c0_32 = arith.constant 0 : index
    %79 = vector.load %arg2[%78, %c0_32] : memref<128x128xf32, #tpu.memory_space<vmem>>, vector<1x128xf32>
    %80 = arith.index_cast %c5_i32 : i32 to index
    %c0_33 = arith.constant 0 : index
    %81 = vector.load %arg3[%80, %c0_33] : memref<8x128xf32, #tpu.memory_space<vmem>>, vector<1x128xf32>
    %82 = arith.addf %79, %81 : vector<1x128xf32>
    %c0_34 = arith.constant 0 : index
    %83 = arith.index_cast %c5_i32 : i32 to index
    %c0_35 = arith.constant 0 : index
    %84 = vector.load %arg4[%c0_34, %83, %c0_35] : memref<2x8x128xf32, #tpu.memory_space<vmem>>, vector<1x1x128xf32>
    %85 = vector.shape_cast %84 : vector<1x1x128xf32> to vector<1x128xf32>
    %86 = vector.shape_cast %82 : vector<1x128xf32> to vector<1x1x128xf32>
    tpu.vector_store %arg4[%c0_34, %83, %c0_35], %86 {strides = array<i32>} : memref<2x8x128xf32, #tpu.memory_space<vmem>>, vector<1x1x128xf32>,
    %c6_i32 = arith.constant 6 : i32
    %87 = arith.addi %2, %c6_i32 : i32
    %88 = arith.index_cast %87 : i32 to index
    %89 = memref.load %arg1[%88] : memref<16xi32, #tpu.memory_space<smem>>
    %c0_i32_36 = arith.constant 0 : i32
    %c127_i32_37 = arith.constant 127 : i32
    %90 = arith.maxsi %c0_i32_36, %89 : i32
    %91 = arith.minsi %c127_i32_37, %90 : i32
    %92 = arith.index_cast %91 : i32 to index
    %c0_38 = arith.constant 0 : index
    %93 = vector.load %arg2[%92, %c0_38] : memref<128x128xf32, #tpu.memory_space<vmem>>, vector<1x128xf32>
    %94 = arith.index_cast %c6_i32 : i32 to index
    %c0_39 = arith.constant 0 : index
    %95 = vector.load %arg3[%94, %c0_39] : memref<8x128xf32, #tpu.memory_space<vmem>>, vector<1x128xf32>
    %96 = arith.addf %93, %95 : vector<1x128xf32>
    %c0_40 = arith.constant 0 : index
    %97 = arith.index_cast %c6_i32 : i32 to index
    %c0_41 = arith.constant 0 : index
    %98 = vector.load %arg4[%c0_40, %97, %c0_41] : memref<2x8x128xf32, #tpu.memory_space<vmem>>, vector<1x1x128xf32>
    %99 = vector.shape_cast %98 : vector<1x1x128xf32> to vector<1x128xf32>
    %100 = vector.shape_cast %96 : vector<1x128xf32> to vector<1x1x128xf32>
    tpu.vector_store %arg4[%c0_40, %97, %c0_41], %100 {strides = array<i32>} : memref<2x8x128xf32, #tpu.memory_space<vmem>>, vector<1x1x128xf32>,
    %c7_i32 = arith.constant 7 : i32
    %101 = arith.addi %2, %c7_i32 : i32
    %102 = arith.index_cast %101 : i32 to index
    %103 = memref.load %arg1[%102] : memref<16xi32, #tpu.memory_space<smem>>
    %c0_i32_42 = arith.constant 0 : i32
    %c127_i32_43 = arith.constant 127 : i32
    %104 = arith.maxsi %c0_i32_42, %103 : i32
    %105 = arith.minsi %c127_i32_43, %104 : i32
    %106 = arith.index_cast %105 : i32 to index
    %c0_44 = arith.constant 0 : index
    %107 = vector.load %arg2[%106, %c0_44] : memref<128x128xf32, #tpu.memory_space<vmem>>, vector<1x128xf32>
    %108 = arith.index_cast %c7_i32 : i32 to index
    %c0_45 = arith.constant 0 : index
    %109 = vector.load %arg3[%108, %c0_45] : memref<8x128xf32, #tpu.memory_space<vmem>>, vector<1x128xf32>
    %110 = arith.addf %107, %109 : vector<1x128xf32>
    %c0_46 = arith.constant 0 : index
    %111 = arith.index_cast %c7_i32 : i32 to index
    %c0_47 = arith.constant 0 : index
    %112 = vector.load %arg4[%c0_46, %111, %c0_47] : memref<2x8x128xf32, #tpu.memory_space<vmem>>, vector<1x1x128xf32>
    %113 = vector.shape_cast %112 : vector<1x1x128xf32> to vector<1x128xf32>
    %114 = vector.shape_cast %110 : vector<1x128xf32> to vector<1x1x128xf32>
    tpu.vector_store %arg4[%c0_46, %111, %c0_47], %114 {strides = array<i32>} : memref<2x8x128xf32, #tpu.memory_space<vmem>>, vector<1x1x128xf32>,
    %c8_i32_48 = arith.constant 8 : i32
    %c2_i32_49 = arith.constant 2 : i32
    %115 = arith.muli %arg0, %c2_i32_49 : i32
    %c1_i32_50 = arith.constant 1 : i32
    %116 = arith.addi %115, %c1_i32_50 : i32
    %c8_i32_51 = arith.constant 8 : i32
    %117 = arith.muli %116, %c8_i32_51 : i32
    %c0_i32_52 = arith.constant 0 : i32
    %118 = arith.addi %117, %c0_i32_52 : i32
    %119 = arith.index_cast %118 : i32 to index
    %120 = memref.load %arg1[%119] : memref<16xi32, #tpu.memory_space<smem>>
    %c0_i32_53 = arith.constant 0 : i32
    %c127_i32_54 = arith.constant 127 : i32
    %121 = arith.maxsi %c0_i32_53, %120 : i32
    %122 = arith.minsi %c127_i32_54, %121 : i32
    %123 = arith.index_cast %122 : i32 to index
    %c0_55 = arith.constant 0 : index
    %124 = vector.load %arg2[%123, %c0_55] : memref<128x128xf32, #tpu.memory_space<vmem>>, vector<1x128xf32>
    %125 = arith.index_cast %c0_i32_52 : i32 to index
    %c0_56 = arith.constant 0 : index
    %126 = vector.load %arg3[%125, %c0_56] : memref<8x128xf32, #tpu.memory_space<vmem>>, vector<1x128xf32>
    %127 = arith.addf %124, %126 : vector<1x128xf32>
    %c1 = arith.constant 1 : index
    %128 = arith.index_cast %c0_i32_52 : i32 to index
    %c0_57 = arith.constant 0 : index
    %129 = vector.load %arg4[%c1, %128, %c0_57] : memref<2x8x128xf32, #tpu.memory_space<vmem>>, vector<1x1x128xf32>
    %130 = vector.shape_cast %129 : vector<1x1x128xf32> to vector<1x128xf32>
    %131 = vector.shape_cast %127 : vector<1x128xf32> to vector<1x1x128xf32>
    tpu.vector_store %arg4[%c1, %128, %c0_57], %131 {strides = array<i32>} : memref<2x8x128xf32, #tpu.memory_space<vmem>>, vector<1x1x128xf32>,
    %c1_i32_58 = arith.constant 1 : i32
    %132 = arith.addi %117, %c1_i32_58 : i32
    %133 = arith.index_cast %132 : i32 to index
    %134 = memref.load %arg1[%133] : memref<16xi32, #tpu.memory_space<smem>>
    %c0_i32_59 = arith.constant 0 : i32
    %c127_i32_60 = arith.constant 127 : i32
    %135 = arith.maxsi %c0_i32_59, %134 : i32
    %136 = arith.minsi %c127_i32_60, %135 : i32
    %137 = arith.index_cast %136 : i32 to index
    %c0_61 = arith.constant 0 : index
    %138 = vector.load %arg2[%137, %c0_61] : memref<128x128xf32, #tpu.memory_space<vmem>>, vector<1x128xf32>
    %139 = arith.index_cast %c1_i32_58 : i32 to index
    %c0_62 = arith.constant 0 : index
    %140 = vector.load %arg3[%139, %c0_62] : memref<8x128xf32, #tpu.memory_space<vmem>>, vector<1x128xf32>
    %141 = arith.addf %138, %140 : vector<1x128xf32>
    %c1_63 = arith.constant 1 : index
    %142 = arith.index_cast %c1_i32_58 : i32 to index
    %c0_64 = arith.constant 0 : index
    %143 = vector.load %arg4[%c1_63, %142, %c0_64] : memref<2x8x128xf32, #tpu.memory_space<vmem>>, vector<1x1x128xf32>
    %144 = vector.shape_cast %143 : vector<1x1x128xf32> to vector<1x128xf32>
    %145 = vector.shape_cast %141 : vector<1x128xf32> to vector<1x1x128xf32>
    tpu.vector_store %arg4[%c1_63, %142, %c0_64], %145 {strides = array<i32>} : memref<2x8x128xf32, #tpu.memory_space<vmem>>, vector<1x1x128xf32>,
    %c2_i32_65 = arith.constant 2 : i32
    %146 = arith.addi %117, %c2_i32_65 : i32
    %147 = arith.index_cast %146 : i32 to index
    %148 = memref.load %arg1[%147] : memref<16xi32, #tpu.memory_space<smem>>
    %c0_i32_66 = arith.constant 0 : i32
    %c127_i32_67 = arith.constant 127 : i32
    %149 = arith.maxsi %c0_i32_66, %148 : i32
    %150 = arith.minsi %c127_i32_67, %149 : i32
    %151 = arith.index_cast %150 : i32 to index
    %c0_68 = arith.constant 0 : index
    %152 = vector.load %arg2[%151, %c0_68] : memref<128x128xf32, #tpu.memory_space<vmem>>, vector<1x128xf32>
    %153 = arith.index_cast %c2_i32_65 : i32 to index
    %c0_69 = arith.constant 0 : index
    %154 = vector.load %arg3[%153, %c0_69] : memref<8x128xf32, #tpu.memory_space<vmem>>, vector<1x128xf32>
    %155 = arith.addf %152, %154 : vector<1x128xf32>
    %c1_70 = arith.constant 1 : index
    %156 = arith.index_cast %c2_i32_65 : i32 to index
    %c0_71 = arith.constant 0 : index
    %157 = vector.load %arg4[%c1_70, %156, %c0_71] : memref<2x8x128xf32, #tpu.memory_space<vmem>>, vector<1x1x128xf32>
    %158 = vector.shape_cast %157 : vector<1x1x128xf32> to vector<1x128xf32>
    %159 = vector.shape_cast %155 : vector<1x128xf32> to vector<1x1x128xf32>
    tpu.vector_store %arg4[%c1_70, %156, %c0_71], %159 {strides = array<i32>} : memref<2x8x128xf32, #tpu.memory_space<vmem>>, vector<1x1x128xf32>,
    %c3_i32_72 = arith.constant 3 : i32
    %160 = arith.addi %117, %c3_i32_72 : i32
    %161 = arith.index_cast %160 : i32 to index
    %162 = memref.load %arg1[%161] : memref<16xi32, #tpu.memory_space<smem>>
    %c0_i32_73 = arith.constant 0 : i32
    %c127_i32_74 = arith.constant 127 : i32
    %163 = arith.maxsi %c0_i32_73, %162 : i32
    %164 = arith.minsi %c127_i32_74, %163 : i32
    %165 = arith.index_cast %164 : i32 to index
    %c0_75 = arith.constant 0 : index
    %166 = vector.load %arg2[%165, %c0_75] : memref<128x128xf32, #tpu.memory_space<vmem>>, vector<1x128xf32>
    %167 = arith.index_cast %c3_i32_72 : i32 to index
    %c0_76 = arith.constant 0 : index
    %168 = vector.load %arg3[%167, %c0_76] : memref<8x128xf32, #tpu.memory_space<vmem>>, vector<1x128xf32>
    %169 = arith.addf %166, %168 : vector<1x128xf32>
    %c1_77 = arith.constant 1 : index
    %170 = arith.index_cast %c3_i32_72 : i32 to index
    %c0_78 = arith.constant 0 : index
    %171 = vector.load %arg4[%c1_77, %170, %c0_78] : memref<2x8x128xf32, #tpu.memory_space<vmem>>, vector<1x1x128xf32>
    %172 = vector.shape_cast %171 : vector<1x1x128xf32> to vector<1x128xf32>
    %173 = vector.shape_cast %169 : vector<1x128xf32> to vector<1x1x128xf32>
    tpu.vector_store %arg4[%c1_77, %170, %c0_78], %173 {strides = array<i32>} : memref<2x8x128xf32, #tpu.memory_space<vmem>>, vector<1x1x128xf32>,
    %c4_i32_79 = arith.constant 4 : i32
    %174 = arith.addi %117, %c4_i32_79 : i32
    %175 = arith.index_cast %174 : i32 to index
    %176 = memref.load %arg1[%175] : memref<16xi32, #tpu.memory_space<smem>>
    %c0_i32_80 = arith.constant 0 : i32
    %c127_i32_81 = arith.constant 127 : i32
    %177 = arith.maxsi %c0_i32_80, %176 : i32
    %178 = arith.minsi %c127_i32_81, %177 : i32
    %179 = arith.index_cast %178 : i32 to index
    %c0_82 = arith.constant 0 : index
    %180 = vector.load %arg2[%179, %c0_82] : memref<128x128xf32, #tpu.memory_space<vmem>>, vector<1x128xf32>
    %181 = arith.index_cast %c4_i32_79 : i32 to index
    %c0_83 = arith.constant 0 : index
    %182 = vector.load %arg3[%181, %c0_83] : memref<8x128xf32, #tpu.memory_space<vmem>>, vector<1x128xf32>
    %183 = arith.addf %180, %182 : vector<1x128xf32>
    %c1_84 = arith.constant 1 : index
    %184 = arith.index_cast %c4_i32_79 : i32 to index
    %c0_85 = arith.constant 0 : index
    %185 = vector.load %arg4[%c1_84, %184, %c0_85] : memref<2x8x128xf32, #tpu.memory_space<vmem>>, vector<1x1x128xf32>
    %186 = vector.shape_cast %185 : vector<1x1x128xf32> to vector<1x128xf32>
    %187 = vector.shape_cast %183 : vector<1x128xf32> to vector<1x1x128xf32>
    tpu.vector_store %arg4[%c1_84, %184, %c0_85], %187 {strides = array<i32>} : memref<2x8x128xf32, #tpu.memory_space<vmem>>, vector<1x1x128xf32>,
    %c5_i32_86 = arith.constant 5 : i32
    %188 = arith.addi %117, %c5_i32_86 : i32
    %189 = arith.index_cast %188 : i32 to index
    %190 = memref.load %arg1[%189] : memref<16xi32, #tpu.memory_space<smem>>
    %c0_i32_87 = arith.constant 0 : i32
    %c127_i32_88 = arith.constant 127 : i32
    %191 = arith.maxsi %c0_i32_87, %190 : i32
    %192 = arith.minsi %c127_i32_88, %191 : i32
    %193 = arith.index_cast %192 : i32 to index
    %c0_89 = arith.constant 0 : index
    %194 = vector.load %arg2[%193, %c0_89] : memref<128x128xf32, #tpu.memory_space<vmem>>, vector<1x128xf32>
    %195 = arith.index_cast %c5_i32_86 : i32 to index
    %c0_90 = arith.constant 0 : index
    %196 = vector.load %arg3[%195, %c0_90] : memref<8x128xf32, #tpu.memory_space<vmem>>, vector<1x128xf32>
    %197 = arith.addf %194, %196 : vector<1x128xf32>
    %c1_91 = arith.constant 1 : index
    %198 = arith.index_cast %c5_i32_86 : i32 to index
    %c0_92 = arith.constant 0 : index
    %199 = vector.load %arg4[%c1_91, %198, %c0_92] : memref<2x8x128xf32, #tpu.memory_space<vmem>>, vector<1x1x128xf32>
    %200 = vector.shape_cast %199 : vector<1x1x128xf32> to vector<1x128xf32>
    %201 = vector.shape_cast %197 : vector<1x128xf32> to vector<1x1x128xf32>
    tpu.vector_store %arg4[%c1_91, %198, %c0_92], %201 {strides = array<i32>} : memref<2x8x128xf32, #tpu.memory_space<vmem>>, vector<1x1x128xf32>,
    %c6_i32_93 = arith.constant 6 : i32
    %202 = arith.addi %117, %c6_i32_93 : i32
    %203 = arith.index_cast %202 : i32 to index
    %204 = memref.load %arg1[%203] : memref<16xi32, #tpu.memory_space<smem>>
    %c0_i32_94 = arith.constant 0 : i32
    %c127_i32_95 = arith.constant 127 : i32
    %205 = arith.maxsi %c0_i32_94, %204 : i32
    %206 = arith.minsi %c127_i32_95, %205 : i32
    %207 = arith.index_cast %206 : i32 to index
    %c0_96 = arith.constant 0 : index
    %208 = vector.load %arg2[%207, %c0_96] : memref<128x128xf32, #tpu.memory_space<vmem>>, vector<1x128xf32>
    %209 = arith.index_cast %c6_i32_93 : i32 to index
    %c0_97 = arith.constant 0 : index
    %210 = vector.load %arg3[%209, %c0_97] : memref<8x128xf32, #tpu.memory_space<vmem>>, vector<1x128xf32>
    %211 = arith.addf %208, %210 : vector<1x128xf32>
    %c1_98 = arith.constant 1 : index
    %212 = arith.index_cast %c6_i32_93 : i32 to index
    %c0_99 = arith.constant 0 : index
    %213 = vector.load %arg4[%c1_98, %212, %c0_99] : memref<2x8x128xf32, #tpu.memory_space<vmem>>, vector<1x1x128xf32>
    %214 = vector.shape_cast %213 : vector<1x1x128xf32> to vector<1x128xf32>
    %215 = vector.shape_cast %211 : vector<1x128xf32> to vector<1x1x128xf32>
    tpu.vector_store %arg4[%c1_98, %212, %c0_99], %215 {strides = array<i32>} : memref<2x8x128xf32, #tpu.memory_space<vmem>>, vector<1x1x128xf32>,
    %c7_i32_100 = arith.constant 7 : i32
    %216 = arith.addi %117, %c7_i32_100 : i32
    %217 = arith.index_cast %216 : i32 to index
    %218 = memref.load %arg1[%217] : memref<16xi32, #tpu.memory_space<smem>>
    %c0_i32_101 = arith.constant 0 : i32
    %c127_i32_102 = arith.constant 127 : i32
    %219 = arith.maxsi %c0_i32_101, %218 : i32
    %220 = arith.minsi %c127_i32_102, %219 : i32
    %221 = arith.index_cast %220 : i32 to index
    %c0_103 = arith.constant 0 : index
    %222 = vector.load %arg2[%221, %c0_103] : memref<128x128xf32, #tpu.memory_space<vmem>>, vector<1x128xf32>
    %223 = arith.index_cast %c7_i32_100 : i32 to index
    %c0_104 = arith.constant 0 : index
    %224 = vector.load %arg3[%223, %c0_104] : memref<8x128xf32, #tpu.memory_space<vmem>>, vector<1x128xf32>
    %225 = arith.addf %222, %224 : vector<1x128xf32>
    %c1_105 = arith.constant 1 : index
    %226 = arith.index_cast %c7_i32_100 : i32 to index
    %c0_106 = arith.constant 0 : index
    %227 = vector.load %arg4[%c1_105, %226, %c0_106] : memref<2x8x128xf32, #tpu.memory_space<vmem>>, vector<1x1x128xf32>
    %228 = vector.shape_cast %227 : vector<1x1x128xf32> to vector<1x128xf32>
    %229 = vector.shape_cast %225 : vector<1x128xf32> to vector<1x1x128xf32>
    tpu.vector_store %arg4[%c1_105, %226, %c0_106], %229 {strides = array<i32>} : memref<2x8x128xf32, #tpu.memory_space<vmem>>, vector<1x1x128xf32>,
    %c8_i32_107 = arith.constant 8 : i32
    return
  }
  func.func @transform_0(%arg0: i32, %arg1: memref<16xi32, #tpu.memory_space<smem>>) -> (i32, i32) {
    %c0_i32 = arith.constant 0 : i32
    %c0_i32_0 = arith.constant 0 : i32
    %c0_i32_1 = arith.constant 0 : i32
    return %c0_i32, %c0_i32_0 : i32, i32
  }
  func.func @transform_1(%arg0: i32, %arg1: memref<16xi32, #tpu.memory_space<smem>>) -> (i32, i32) {
    %c0_i32 = arith.constant 0 : i32
    %c0_i32_0 = arith.constant 0 : i32
    %c0_i32_1 = arith.constant 0 : i32
    return %c0_i32, %c0_i32_0 : i32, i32
  }
  func.func @transform_2(%arg0: i32, %arg1: memref<16xi32, #tpu.memory_space<smem>>) -> (i32, i32, i32) {
    %c0_i32 = arith.constant 0 : i32
    %c0_i32_0 = arith.constant 0 : i32
    %c0_i32_1 = arith.constant 0 : i32
    return %arg0, %c0_i32, %c0_i32_0 : i32, i32, i32
  }
}

</mosaic_0001>

<llo_original>
// kernel: tpu_custom_call.1
$region0: #{tpu_custom_call.1}
  #allocation0 [shape = 'u32[]', space=smem, size = 0x4, offset = 0x4, fixed_abs, tag = 'smem constant byte address 0x4 - core index']
  #allocation1 [shape = 'u32[72,128]{1,0:T(1,128)}', space=vmem, size = 0x9000, scoped, tag = 'internal scratch']
  #allocation2 [shape = 's32[1]{0}', space=sflag, size = 0x4, scoped, tag = 'scoped memory for tpu_custom_call.1']
  #allocation3 [shape = 'u8[512]{0}', space=smem, size = 0x200, scoped, tag = 'prefetched SMEM operand 0']
  %s0 = inlined_call_operand.hbm [shape: s32[16], index: 0, kind: input, shape index: {}]
  %s1 = inlined_call_operand.hbm [shape: f32[128,128], index: 1, kind: input, shape index: {}]
  %s2 = inlined_call_operand.hbm [shape: f32[128,128], index: 2, kind: input, shape index: {}]
  %s3 = inlined_call_operand.hbm [shape: f32[2,8,128], index: 3, kind: output, shape index: {}]
  %s4 = sld [smem:[#allocation0]]
  $region26: #{tpu_custom_call.1} parent=0
    _
  %s6 = ssub.s32 1, %s4
  %s7 = scalar_select 0, %s6, %s4
  %s9 = sshll.u32 %s0, 4
  %s10 = int_to_ptr.hbm [resolvable:$true] %s9
  %12 = dma.hbm_to_smem %s10, 16, [#allocation3], [#allocation2]
  %14 = dma.done [#allocation2], 16
  %15 = sfence
  $region1: #{tpu_custom_call.1} parent=0
    #allocation4 [shape = 'u8[65536]{0}', space=vmem, size = 0x10000, scoped, tag = 'input window, operand 1, single buffered']
    #allocation5 [shape = 's32[1]{0}', space=sflag, size = 0x4, scoped, tag = 'scoped memory for tpu_custom_call.1']
    #allocation6 [shape = 's32[1]{0}', space=sflag, size = 0x4, scoped, tag = 'scoped memory for tpu_custom_call.1']
    #allocation7 [shape = 'u8[4096]{0}', space=vmem, size = 0x1000, scoped, tag = 'input window, operand 2, single buffered']
    #allocation8 [shape = 's32[1]{0}', space=sflag, size = 0x4, scoped, tag = 'scoped memory for tpu_custom_call.1']
    #allocation9 [shape = 'u8[8192]{0}', space=vmem, size = 0x2000, scoped, tag = 'output window, operand 0, single buffered']
    %16 = vsyncpa [#allocation5], 0
    %17 = vsyncpa [#allocation8], 0
    %18 = vsyncpa [#allocation6], 0
    // Predicated region
    $region2: #{tpu_custom_call.1} parent=1 // pred_check
      _
    $region3: #{tpu_custom_call.1} parent=1 // pred_check_branch
      %20 = sbr.rel (0) target = $region5
    $region4: #{tpu_custom_call.1} parent=1 // pred_region
      %22 = vsyncadd [#allocation5], 0
      %s23 = sshll.u32 %s1, 4
      %s24 = int_to_ptr.hbm [resolvable:$true] %s23
      %s25 = sshll.u32 [#allocation4], 4
      %s26 = int_to_ptr.vmem [resolvable:$true] %s25
      %31 = dma.hbm_to_vmem [thread:$0]  %s24, 2048, %s26, [#allocation5], 128, 128, 8
    $region5: #{tpu_custom_call.1} parent=1 // pred_fallthru
      _
    // Predicated region
    $region6: #{tpu_custom_call.1} parent=1 // pred_check
      _
    $region7: #{tpu_custom_call.1} parent=1 // pred_check_branch
      %33 = sbr.rel (0) target = $region9
    $region8: #{tpu_custom_call.1} parent=1 // pred_region
      %35 = vsyncadd [#allocation8], 0
      %s37 = sshll.u32 %s2, 4
      %s38 = int_to_ptr.hbm [resolvable:$true] %s37
      %s39 = sshll.u32 [#allocation7], 4
      %s40 = int_to_ptr.vmem [resolvable:$true] %s39
      %42 = dma.hbm_to_vmem [thread:$0]  %s38, 128, %s40, [#allocation8]
    $region9: #{tpu_custom_call.1} parent=1 // pred_fallthru
      _
    // Predicated region
    $region10: #{tpu_custom_call.1} parent=1 // pred_check
      _
    $region11: #{tpu_custom_call.1} parent=1 // pred_check_branch
      %44 = sbr.rel (0) target = $region13
    $region12: #{tpu_custom_call.1} parent=1 // pred_region
      %46 = dma.done [#allocation5], 2048
    $region13: #{tpu_custom_call.1} parent=1 // pred_fallthru
      _
    // Predicated region
    $region14: #{tpu_custom_call.1} parent=1 // pred_check
      _
    $region15: #{tpu_custom_call.1} parent=1 // pred_check_branch
      %48 = sbr.rel (0) target = $region17
    $region16: #{tpu_custom_call.1} parent=1 // pred_region
      %50 = dma.done [#allocation8], 128
    $region17: #{tpu_custom_call.1} parent=1 // pred_fallthru
      _
    %s51 = smul.u32 0, 16
    %s52 = sld [smem:[#allocation3 + %s51]]
    %p53 = scmp.gt.s32.totalorder %s52, 0
    %s54 = scalar_select %p53, %s52, 0
    %p55 = scmp.lt.s32.totalorder %s54, 127
    %s56 = scalar_select %p55, %s54, 127
    %s57 = scalar_lea.vmem [#allocation4], %s56
    %v58 = vld [vmem:[%s57] sm:$0x1]
    %v59 = vld [vmem:[#allocation7] sm:$0x1]
    %v60 = vadd.f32 %v58, %v59
    %61 = vst [vmem:[#allocation9] sm:$0x1] %v60
    %s62 = sadd.s32 %s51, 1
    %s63 = sld [smem:[#allocation3 + %s62]]
    %p64 = scmp.gt.s32.totalorder %s63, 0
    %s65 = scalar_select %p64, %s63, 0
    %p66 = scmp.lt.s32.totalorder %s65, 127
    %s67 = scalar_select %p66, %s65, 127
    %s68 = scalar_lea.vmem [#allocation4], %s67
    %v69 = vld [vmem:[%s68] sm:$0x1]
    %v70 = vld [vmem:[#allocation7 + $0x1] sm:$0x1]
    %v71 = vadd.f32 %v69, %v70
    %72 = vst [vmem:[#allocation9 + $0x1] sm:$0x1] %v71
    %s73 = sadd.s32 %s51, 2
    %s74 = sld [smem:[#allocation3 + %s73]]
    %p75 = scmp.gt.s32.totalorder %s74, 0
    %s76 = scalar_select %p75, %s74, 0
    %p77 = scmp.lt.s32.totalorder %s76, 127
    %s78 = scalar_select %p77, %s76, 127
    %s79 = scalar_lea.vmem [#allocation4], %s78
    %v80 = vld [vmem:[%s79] sm:$0x1]
    %v81 = vld [vmem:[#allocation7 + $0x2] sm:$0x1]
    %v82 = vadd.f32 %v80, %v81
    %83 = vst [vmem:[#allocation9 + $0x2] sm:$0x1] %v82
    %s84 = sadd.s32 %s51, 3
    %s85 = sld [smem:[#allocation3 + %s84]]
    %p86 = scmp.gt.s32.totalorder %s85, 0
    %s87 = scalar_select %p86, %s85, 0
    %p88 = scmp.lt.s32.totalorder %s87, 127
    %s89 = scalar_select %p88, %s87, 127
    %s90 = scalar_lea.vmem [#allocation4], %s89
    %v91 = vld [vmem:[%s90] sm:$0x1]
    %v92 = vld [vmem:[#allocation7 + $0x3] sm:$0x1]
    %v93 = vadd.f32 %v91, %v92
    %94 = vst [vmem:[#allocation9 + $0x3] sm:$0x1] %v93
    %s95 = sadd.s32 %s51, 4
    %s96 = sld [smem:[#allocation3 + %s95]]
    %p97 = scmp.gt.s32.totalorder %s96, 0
    %s98 = scalar_select %p97, %s96, 0
    %p99 = scmp.lt.s32.totalorder %s98, 127
    %s100 = scalar_select %p99, %s98, 127
    %s101 = scalar_lea.vmem [#allocation4], %s100
    %v102 = vld [vmem:[%s101] sm:$0x1]
    %v103 = vld [vmem:[#allocation7 + $0x4] sm:$0x1]
    %v104 = vadd.f32 %v102, %v103
    %105 = vst [vmem:[#allocation9 + $0x4] sm:$0x1] %v104
    %s106 = sadd.s32 %s51, 5
    %s107 = sld [smem:[#allocation3 + %s106]]
    %p108 = scmp.gt.s32.totalorder %s107, 0
    %s109 = scalar_select %p108, %s107, 0
    %p110 = scmp.lt.s32.totalorder %s109, 127
    %s111 = scalar_select %p110, %s109, 127
    %s112 = scalar_lea.vmem [#allocation4], %s111
    %v113 = vld [vmem:[%s112] sm:$0x1]
    %v114 = vld [vmem:[#allocation7 + $0x5] sm:$0x1]
    %v115 = vadd.f32 %v113, %v114
    %116 = vst [vmem:[#allocation9 + $0x5] sm:$0x1] %v115
    %s117 = sadd.s32 %s51, 6
    %s118 = sld [smem:[#allocation3 + %s117]]
    %p119 = scmp.gt.s32.totalorder %s118, 0
    %s120 = scalar_select %p119, %s118, 0
    %p121 = scmp.lt.s32.totalorder %s120, 127
    %s122 = scalar_select %p121, %s120, 127
    %s123 = scalar_lea.vmem [#allocation4], %s122
    %v124 = vld [vmem:[%s123] sm:$0x1]
    %v125 = vld [vmem:[#allocation7 + $0x6] sm:$0x1]
    %v126 = vadd.f32 %v124, %v125
    %127 = vst [vmem:[#allocation9 + $0x6] sm:$0x1] %v126
    %s128 = sadd.s32 %s51, 7
    %s129 = sld [smem:[#allocation3 + %s128]]
    %p130 = scmp.gt.s32.totalorder %s129, 0
    %s131 = scalar_select %p130, %s129, 0
    %p132 = scmp.lt.s32.totalorder %s131, 127
    %s133 = scalar_select %p132, %s131, 127
    %s134 = scalar_lea.vmem [#allocation4], %s133
    %v135 = vld [vmem:[%s134] sm:$0x1]
    %v136 = vld [vmem:[#allocation7 + $0x7] sm:$0x1]
    %v137 = vadd.f32 %v135, %v136
    %138 = vst [vmem:[#allocation9 + $0x7] sm:$0x1] %v137
    %s139 = smul.u32 0, 2
    %s140 = sadd.s32 %s139, 1
    %s141 = smul.u32 %s140, 8
    %s142 = sld [smem:[#allocation3 + %s141]]
    %p143 = scmp.gt.s32.totalorder %s142, 0
    %s144 = scalar_select %p143, %s142, 0
    %p145 = scmp.lt.s32.totalorder %s144, 127
    %s146 = scalar_select %p145, %s144, 127
    %s147 = scalar_lea.vmem [#allocation4], %s146
    %v148 = vld [vmem:[%s147] sm:$0x1]
    %v149 = vld [vmem:[#allocation7] sm:$0x1]
    %v150 = vadd.f32 %v148, %v149
    %s151 = scalar_lea.vmem [#allocation9], 8
    %152 = vst [vmem:[%s151] sm:$0x1] %v150
    %s153 = sadd.s32 %s141, 1
    %s154 = sld [smem:[#allocation3 + %s153]]
    %p155 = scmp.gt.s32.totalorder %s154, 0
    %s156 = scalar_select %p155, %s154, 0
    %p157 = scmp.lt.s32.totalorder %s156, 127
    %s158 = scalar_select %p157, %s156, 127
    %s159 = scalar_lea.vmem [#allocation4], %s158
    %v160 = vld [vmem:[%s159] sm:$0x1]
    %v161 = vld [vmem:[#allocation7 + $0x1] sm:$0x1]
    %v162 = vadd.f32 %v160, %v161
    %163 = vst [vmem:[%s151 + $0x1] sm:$0x1] %v162
    %s164 = sadd.s32 %s141, 2
    %s165 = sld [smem:[#allocation3 + %s164]]
    %p166 = scmp.gt.s32.totalorder %s165, 0
    %s167 = scalar_select %p166, %s165, 0
    %p168 = scmp.lt.s32.totalorder %s167, 127
    %s169 = scalar_select %p168, %s167, 127
    %s170 = scalar_lea.vmem [#allocation4], %s169
    %v171 = vld [vmem:[%s170] sm:$0x1]
    %v172 = vld [vmem:[#allocation7 + $0x2] sm:$0x1]
    %v173 = vadd.f32 %v171, %v172
    %174 = vst [vmem:[%s151 + $0x2] sm:$0x1] %v173
    %s175 = sadd.s32 %s141, 3
    %s176 = sld [smem:[#allocation3 + %s175]]
    %p177 = scmp.gt.s32.totalorder %s176, 0
    %s178 = scalar_select %p177, %s176, 0
    %p179 = scmp.lt.s32.totalorder %s178, 127
    %s180 = scalar_select %p179, %s178, 127
    %s181 = scalar_lea.vmem [#allocation4], %s180
    %v182 = vld [vmem:[%s181] sm:$0x1]
    %v183 = vld [vmem:[#allocation7 + $0x3] sm:$0x1]
    %v184 = vadd.f32 %v182, %v183
    %185 = vst [vmem:[%s151 + $0x3] sm:$0x1] %v184
    %s186 = sadd.s32 %s141, 4
    %s187 = sld [smem:[#allocation3 + %s186]]
    %p188 = scmp.gt.s32.totalorder %s187, 0
    %s189 = scalar_select %p188, %s187, 0
    %p190 = scmp.lt.s32.totalorder %s189, 127
    %s191 = scalar_select %p190, %s189, 127
    %s192 = scalar_lea.vmem [#allocation4], %s191
    %v193 = vld [vmem:[%s192] sm:$0x1]
    %v194 = vld [vmem:[#allocation7 + $0x4] sm:$0x1]
    %v195 = vadd.f32 %v193, %v194
    %196 = vst [vmem:[%s151 + $0x4] sm:$0x1] %v195
    %s197 = sadd.s32 %s141, 5
    %s198 = sld [smem:[#allocation3 + %s197]]
    %p199 = scmp.gt.s32.totalorder %s198, 0
    %s200 = scalar_select %p199, %s198, 0
    %p201 = scmp.lt.s32.totalorder %s200, 127
    %s202 = scalar_select %p201, %s200, 127
    %s203 = scalar_lea.vmem [#allocation4], %s202
    %v204 = vld [vmem:[%s203] sm:$0x1]
    %v205 = vld [vmem:[#allocation7 + $0x5] sm:$0x1]
    %v206 = vadd.f32 %v204, %v205
    %207 = vst [vmem:[%s151 + $0x5] sm:$0x1] %v206
    %s208 = sadd.s32 %s141, 6
    %s209 = sld [smem:[#allocation3 + %s208]]
    %p210 = scmp.gt.s32.totalorder %s209, 0
    %s211 = scalar_select %p210, %s209, 0
    %p212 = scmp.lt.s32.totalorder %s211, 127
    %s213 = scalar_select %p212, %s211, 127
    %s214 = scalar_lea.vmem [#allocation4], %s213
    %v215 = vld [vmem:[%s214] sm:$0x1]
    %v216 = vld [vmem:[#allocation7 + $0x6] sm:$0x1]
    %v217 = vadd.f32 %v215, %v216
    %218 = vst [vmem:[%s151 + $0x6] sm:$0x1] %v217
    %s219 = sadd.s32 %s141, 7
    %s220 = sld [smem:[#allocation3 + %s219]]
    %p221 = scmp.gt.s32.totalorder %s220, 0
    %s222 = scalar_select %p221, %s220, 0
    %p223 = scmp.lt.s32.totalorder %s222, 127
    %s224 = scalar_select %p223, %s222, 127
    %s225 = scalar_lea.vmem [#allocation4], %s224
    %v226 = vld [vmem:[%s225] sm:$0x1]
    %v227 = vld [vmem:[#allocation7 + $0x7] sm:$0x1]
    %v228 = vadd.f32 %v226, %v227
    %229 = vst [vmem:[%s151 + $0x7] sm:$0x1] %v228
    // Predicated region
    $region18: #{tpu_custom_call.1} parent=1 // pred_check
      _
    $region19: #{tpu_custom_call.1} parent=1 // pred_check_branch
      %231 = sbr.rel (0) target = $region21
    $region20: #{tpu_custom_call.1} parent=1 // pred_region
      %233 = vsyncadd [#allocation6], 0
      %s234 = sshll.u32 [#allocation9], 4
      %s235 = int_to_ptr.vmem [resolvable:$true] %s234
      %s236 = sshll.u32 %s3, 4
      %s237 = int_to_ptr.hbm [resolvable:$true] %s236
      %242 = dma.vmem_to_hbm [thread:$0]  %s235, 256, %s237, [#allocation6], 128, 128, 8
    $region21: #{tpu_custom_call.1} parent=1 // pred_fallthru
      _
    // Predicated region
    $region22: #{tpu_custom_call.1} parent=1 // pred_check
      _
    $region23: #{tpu_custom_call.1} parent=1 // pred_check_branch
      %244 = sbr.rel (0) target = $region25
    $region24: #{tpu_custom_call.1} parent=1 // pred_region
      %246 = dma.done [#allocation6], 256
    $region25: #{tpu_custom_call.1} parent=1 // pred_fallthru
      _
    %247 = vsyncpa [#allocation5], 1
    %248 = vsyncpa [#allocation8], 1
    %249 = vsyncpa [#allocation6], 1

</llo_original>
